<compile_context>
chip_gen: v7x
topology: tpu7x:2x2x1
jax: 0.10.0
libtpu: 0.0.40
codegen_flags: <defaults>
</compile_context>

<pallas_src>
import functools

import jax
import jax.numpy as jnp
from jax import lax
from jax.experimental import pallas as pl
from jax.experimental.pallas import tpu as pltpu


def _prenorm_layernorm_kernel(x_ref, g_ref, o_ref, *, eps: float, epilogue=None):
    # x_ref / o_ref: (C, ts) tiles (leading batch dim squeezed); g_ref: (C, 1) f32.
    x = x_ref[...].astype(jnp.float32)
    mean = jnp.mean(x, axis=0, keepdims=True)          # (1, ts)
    xm = x - mean                                      # centered, reused
    var = jnp.mean(xm * xm, axis=0, keepdims=True)     # biased variance
    y = xm * lax.rsqrt(var + eps) * g_ref[...]         # gamma already f32
    if epilogue is not None:                           # fused elementwise fn
        # Note: epilogue runs on f32 before the cast (tiny divergence vs the
        # unfused path, which applies fn after casting to x.dtype).
        y = epilogue(y)
    o_ref[...] = y.astype(o_ref.dtype)


def _device_profile():
    """Returns (multi_core, block_budget_bytes, max_tile_lanes, vmem_limit_cap)."""
    try:
        kind = jax.devices()[0].device_kind.lower()
    except Exception:
        kind = ""
    if "v7" in kind:
        # 2 TensorCores / chip, 64 MiB physical VMEM per TC -> stay well under.
        return True, 36 << 20, 1 << 16, 48 << 20
    if "v5p" in kind or "v4" in kind:
        # Megacore parts: "parallel" grid axes shard across 2 cores.
        return True, 48 << 20, 1 << 15, 96 << 20
    # v5e / v6e: single TensorCore, 128 MiB physical VMEM.
    return False, 48 << 20, 1 << 15, 96 << 20


def _pick_spatial_tile(S, C, itemsize, *, batch, multi_core,
                       block_budget_bytes, max_tile_lanes):
    """Pick a lane-dense spatial tile (multiple of 128, <= S) for a cdiv grid."""
    if S <= 128:
        return S                                       # single full-extent block
    # Per-step VMEM model: double-buffered (in + out) blocks = 4*C*ts*itemsize,
    # plus ~3 in-kernel f32 temporaries (x, xm, y) = 12*C*ts bytes.
    per_lane = C * (4 * itemsize + 12)
    cap = max(128, (block_budget_bytes // per_lane) // 128 * 128)
    ts = min(cap, max_tile_lanes, (S // 128) * 128)
    if batch == 1 and multi_core:
        # Keep >= 2 spatial grid points so both TensorCores get work.
        half_cols = -(-(S // 128) // 2)
        ts = min(ts, 128 * max(1, half_cols))
    return max(ts, 128)


def channel_layernorm(x, gamma, *, eps=1e-5, elementwise_epilogue=None):
    """x: (B, C, D, H, W) NCDHW, gamma: (1, C, 1, 1, 1). Returns same shape."""
    B, C, D, H, W = x.shape
    S = D * H * W
    x2 = x.reshape(B, C, S)
    g2 = gamma.reshape(C, 1).astype(jnp.float32)       # pre-cast once, resident

    multi_core, budget, max_tile, vmem_cap = _device_profile()
    ts = _pick_spatial_tile(S, C, x.dtype.itemsize, batch=B,
                            multi_core=multi_core,
                            block_budget_bytes=budget,
                            max_tile_lanes=max_tile)
    grid = (B, pl.cdiv(S, ts))

    # Real footprint: double-buffered in/out blocks + ~3 f32 temps + slack.
    footprint = C * ts * (4 * x.dtype.itemsize + 12) + C * 8 + (2 << 20)
    vmem_limit = int(min(vmem_cap, max(32 << 20, footprint)))

    out = pl.pallas_call(
        functools.partial(_prenorm_layernorm_kernel, eps=eps,
                          epilogue=elementwise_epilogue),
        out_shape=jax.ShapeDtypeStruct((B, C, S), x.dtype),
        grid_spec=pltpu.PrefetchScalarGridSpec(
            num_scalar_prefetch=0,
            grid=grid,
            in_specs=[
                pl.BlockSpec((pl.Squeezed(), C, ts), lambda b, s: (b, 0, s)),
                pl.BlockSpec((C, 1), lambda b, s: (0, 0)),
            ],
            out_specs=pl.BlockSpec((pl.Squeezed(), C, ts), lambda b, s: (b, 0, s)),
        ),
        compiler_params=pltpu.CompilerParams(
            dimension_semantics=("parallel", "parallel"),
            vmem_limit_bytes=vmem_limit,
        ),
    )(x2, g2)

    return out.reshape(B, C, D, H, W)


class PreNorm:
    """PreNorm(dim, fn): x -> fn(channel_layernorm(x)).

    If `fuse_fn_if_elementwise=True`, fn is applied inside the kernel epilogue
    (valid only for pointwise fn; avoids an extra HBM round-trip). The wrapped
    fn in unet3d is generally a full block (attention / conv), so by default it
    runs as plain JAX on the normalized output.
    """

    def __init__(self, dim, fn, eps=1e-5, fuse_fn_if_elementwise=False):
        self.fn = fn
        self.eps = eps
        self.fuse = fuse_fn_if_elementwise
        # nn.Parameter(torch.ones(1, dim, 1, 1, 1)) -> deterministic init
        self.gamma = jnp.ones((1, dim, 1, 1, 1), dtype=jnp.float32)

    def __call__(self, x, **kwargs):
        if self.fuse and not kwargs:
            # TODO(synk): fusion path only valid for elementwise fn.
            return channel_layernorm(x, self.gamma, eps=self.eps,
                                     elementwise_epilogue=self.fn)
        x = channel_layernorm(x, self.gamma, eps=self.eps)
        return self.fn(x, **kwargs)


def _reference(x, gamma, eps=1e-5):
    mean = jnp.mean(x, axis=1, keepdims=True)
    var = jnp.mean((x - mean) ** 2, axis=1, keepdims=True)
    return (x - mean) / jnp.sqrt(var + eps) * gamma


if __name__ == "__main__":
    key = jax.random.PRNGKey(0)

    # Case 1: 128-divisible spatial extent (S = 256), B > 1.
    B, C, D, H, W = 2, 8, 4, 8, 8
    x = jax.random.normal(key, (B, C, D, H, W), dtype=jnp.float32)
    module = PreNorm(C, fn=lambda t: t)   # fn arbitrary; identity here
    y = jax.block_until_ready(module(x))
    y_ref = _reference(x, module.gamma)
    assert y.shape == x.shape
    assert jnp.allclose(y, y_ref, atol=1e-5, rtol=1e-5)

    # Case 2: tiny spatial extent (S = 105 < 128) -> single full-extent block.
    B2, C2, D2, H2, W2 = 1, 4, 3, 5, 7
    x2 = jax.random.normal(jax.random.PRNGKey(1), (B2, C2, D2, H2, W2),
                           dtype=jnp.float32)
    module2 = PreNorm(C2, fn=lambda t: t)
    y2 = jax.block_until_ready(module2(x2))
    y2_ref = _reference(x2, module2.gamma)
    assert y2.shape == x2.shape
    assert jnp.allclose(y2, y2_ref, atol=1e-5, rtol=1e-5)

    # Case 3: non-128-divisible S > 128 (S = 300) -> cdiv grid, masked last tile.
    B3, C3, D3, H3, W3 = 1, 8, 3, 10, 10
    x3 = jax.random.normal(jax.random.PRNGKey(2), (B3, C3, D3, H3, W3),
                           dtype=jnp.float32)
    module3 = PreNorm(C3, fn=lambda t: t)
    y3 = jax.block_until_ready(module3(x3))
    y3_ref = _reference(x3, module3.gamma)
    assert y3.shape == x3.shape
    assert jnp.allclose(y3, y3_ref, atol=1e-5, rtol=1e-5)

    print("KERNEL_OK")
</pallas_src>

<mosaic_0001>
module attributes {stable_mosaic.version = 11 : i64} {
  func.func @_prenorm_layernorm_kernel(%arg0: i32, %arg1: i32, %arg2: memref<1x8x256xf32, #tpu.memory_space<vmem>>, %arg3: memref<8x1xf32, #tpu.memory_space<vmem>>, %arg4: memref<1x8x256xf32, #tpu.memory_space<vmem>>) attributes {dimension_semantics = [#tpu.dimension_semantics<parallel>, #tpu.dimension_semantics<parallel>], iteration_bounds = array<i64: 2, 1>, scalar_prefetch = 0 : i64, scratch_operands = 0 : i64, tpu.core_type = #tpu.core_type<tc>, window_params = [{transform_indices = @transform_0, window_bounds = array<i64: 1, 8, 256>}, {pipeline_mode = #tpu.pipeline_mode<synchronous>, transform_indices = @transform_1, window_bounds = array<i64: 8, 1>}, {transform_indices = @transform_2, window_bounds = array<i64: 1, 8, 256>}]} {
    %c0 = arith.constant 0 : index
    %c0_0 = arith.constant 0 : index
    %c0_1 = arith.constant 0 : index
    %0 = vector.load %arg2[%c0, %c0_0, %c0_1] : memref<1x8x256xf32, #tpu.memory_space<vmem>>, vector<1x8x256xf32>
    %1 = vector.shape_cast %0 : vector<1x8x256xf32> to vector<8x256xf32>
    %cst = arith.constant dense<0.000000e+00> : vector<256xf32>
    %2 = vector.multi_reduction <add>, %1, %cst [0] : vector<8x256xf32> to vector<256xf32>
    %3 = vector.shape_cast %2 : vector<256xf32> to vector<1x256xf32>
    %cst_2 = arith.constant 8.000000e+00 : f32
    %4 = vector.broadcast %cst_2 : f32 to vector<1x256xf32>
    %5 = arith.divf %3, %4 : vector<1x256xf32>
    %6 = vector.broadcast %5 : vector<1x256xf32> to vector<8x256xf32>
    %7 = arith.subf %1, %6 : vector<8x256xf32>
    %8 = arith.mulf %7, %7 : vector<8x256xf32>
    %cst_3 = arith.constant dense<0.000000e+00> : vector<256xf32>
    %9 = vector.multi_reduction <add>, %8, %cst_3 [0] : vector<8x256xf32> to vector<256xf32>
    %10 = vector.shape_cast %9 : vector<256xf32> to vector<1x256xf32>
    %cst_4 = arith.constant 8.000000e+00 : f32
    %11 = vector.broadcast %cst_4 : f32 to vector<1x256xf32>
    %12 = arith.divf %10, %11 : vector<1x256xf32>
    %cst_5 = arith.constant 9.99999974E-6 : f32
    %13 = vector.broadcast %cst_5 : f32 to vector<1x256xf32>
    %14 = arith.addf %12, %13 : vector<1x256xf32>
    %15 = math.rsqrt %14 : vector<1x256xf32>
    %16 = vector.broadcast %15 : vector<1x256xf32> to vector<8x256xf32>
    %17 = arith.mulf %7, %16 : vector<8x256xf32>
    %c0_6 = arith.constant 0 : index
    %c0_7 = arith.constant 0 : index
    %18 = vector.load %arg3[%c0_6, %c0_7] : memref<8x1xf32, #tpu.memory_space<vmem>>, vector<8x1xf32>
    %19 = vector.broadcast %18 : vector<8x1xf32> to vector<8x256xf32>
    %20 = arith.mulf %17, %19 : vector<8x256xf32>
    %c0_8 = arith.constant 0 : index
    %c0_9 = arith.constant 0 : index
    %c0_10 = arith.constant 0 : index
    %21 = vector.load %arg4[%c0_8, %c0_9, %c0_10] : memref<1x8x256xf32, #tpu.memory_space<vmem>>, vector<1x8x256xf32>
    %22 = vector.shape_cast %21 : vector<1x8x256xf32> to vector<8x256xf32>
    %23 = vector.shape_cast %20 : vector<8x256xf32> to vector<1x8x256xf32>
    tpu.vector_store %arg4[%c0_8, %c0_9, %c0_10], %23 {strides = array<i32>} : memref<1x8x256xf32, #tpu.memory_space<vmem>>, vector<1x8x256xf32>,
    return
  }
  func.func @transform_0(%arg0: i32, %arg1: i32) -> (i32, i32, i32) {
    %c0_i32 = arith.constant 0 : i32
    %c0_i32_0 = arith.constant 0 : i32
    return %arg0, %c0_i32, %arg1 : i32, i32, i32
  }
  func.func @transform_1(%arg0: i32, %arg1: i32) -> (i32, i32) {
    %c0_i32 = arith.constant 0 : i32
    %c0_i32_0 = arith.constant 0 : i32
    %c0_i32_1 = arith.constant 0 : i32
    return %c0_i32, %c0_i32_0 : i32, i32
  }
  func.func @transform_2(%arg0: i32, %arg1: i32) -> (i32, i32, i32) {
    %c0_i32 = arith.constant 0 : i32
    %c0_i32_0 = arith.constant 0 : i32
    return %arg0, %c0_i32, %arg1 : i32, i32, i32
  }
}

</mosaic_0001>

<llo_original>
// kernel: tpu_custom_call.1
$region0: #{tpu_custom_call.1}
  #allocation0 [shape = 'u32[]', space=smem, size = 0x4, offset = 0x4, fixed_abs, tag = 'smem constant byte address 0x4 - core index']
  #allocation1 [shape = 'u32[144,128]{1,0:T(1,128)}', space=vmem, size = 0x12000, scoped, tag = 'internal scratch']
  %s0 = inlined_call_operand.hbm [shape: f32[2,8,256], index: 0, kind: input, shape index: {}]
  %s1 = inlined_call_operand.vmem [shape: f32[8,1], index: 1, kind: input, shape index: {}]
  %s2 = inlined_call_operand.hbm [shape: f32[2,8,256], index: 2, kind: output, shape index: {}]
  %s3 = sld [smem:[#allocation0]]
  $region45: #{tpu_custom_call.1} parent=0
    _
  %s5 = ssub.s32 1, %s3
  %s6 = scalar_select 0, %s5, %s3
  $region1: #{tpu_custom_call.1} parent=0
    #allocation2 [shape = 'u8[16384]{0}', space=vmem, size = 0x4000, scoped, tag = 'input window, operand 0']
    #allocation3 [shape = 's32[2]{0}', space=sflag, size = 0x8, scoped, tag = 'scoped memory for tpu_custom_call.1']
    #allocation4 [shape = 's32[2]{0}', space=sflag, size = 0x8, scoped, tag = 'scoped memory for tpu_custom_call.1']
    #allocation5 [shape = 'u8[16384]{0}', space=vmem, size = 0x4000, scoped, tag = 'output window, operand 0']
    %7 = vsyncpa [#allocation3], 0
    %s8 = scalar_lea.sflag [#allocation3], 1
    %9 = vsyncpa %s8, 0
    %10 = vsyncpa [#allocation4], 0
    %s11 = scalar_lea.sflag [#allocation4], 1
    %12 = vsyncpa %s11, 0
    loop: start=0, step=1, limit=4
    $region2: #{tpu_custom_call.1} parent=1 // loop_pre_header
      _
    $region3: #{tpu_custom_call.1} parent=1 // loop_header
      %s14 = sphi 0, %s18
      %p15 = scmp.ge.s32.totalorder %s14, 4
      %s21 = sphi 0, %s33
      %s22 = sphi 0, %s29
      %s23 = sphi 0, %s21
      %s24 = sphi 0, %s22
      %s25 = sphi 0, %s23
      %s26 = sphi 0, %s24
      %s38 = sphi 0, %s40
      %s41 = sphi 0, %s38
      %s42 = sphi 0, %s41
      %s58 = sphi 0, %s42
      %s62 = sphi 0, %s62
      %s64 = sphi 0, %s62
      %s65 = sphi 0, %s64
      %s79 = sphi 0, %s65
      %s87 = sphi 0, %s89
      %s90 = sphi 0, %s87
      %s91 = sphi 0, %s90
      %s107 = sphi 0, %s91
    $region4: #{tpu_custom_call.1} parent=1 // loop_header_branch
      %17 = sbr.rel (%p15) target = $region8
    $region5: #{tpu_custom_call.1} parent=1 // loop_body
      %s19 = ssub.s32 %s14, 1
      %s20 = ssub.s32 %s14, 2
      %s27 = sadd.s32 1, %s22
      %p28 = scmp.ge.s32.totalorder %s27, 1
      %s29 = scalar_select %p28, 0, %s27
      %s30 = sadd.s32 1, %s21
      %s31 = scalar_select %p28, %s30, %s21
      %p32 = scmp.ge.s32.totalorder %s31, 2
      %s33 = scalar_select %p32, 0, %s31
      %s34 = ssub.s32 %s21, %s33
      %s35 = ssub.s32 %s22, %s29
      %s36 = sor.u32 %s34, %s35
      %p37 = scmp.eq.s32.totalorder %s36, 0
      %s39 = sadd.s32 %s38, 1
      %s40 = scalar_select %p37, %s38, %s39
      %p43 = pneg %p37
      %p44 = scmp.eq.s32.totalorder %s14, 1
      %p45 = por %p43, %p44
      %p46 = scmp.ne.s32.totalorder %s38, %s41
      %p47 = scmp.eq.s32.totalorder %s14, 0
      %p48 = por %p46, %p47
      %p49 = scmp.ne.s32.totalorder %s38, %s41
      %p50 = scmp.eq.s32.totalorder %s19, 1
      %p51 = por %p49, %p50
      %p52 = scmp.ne.s32.totalorder %s41, %s42
      %p53 = scmp.eq.s32.totalorder %s19, 0
      %p54 = por %p52, %p53
      %p55 = scmp.ne.s32.totalorder %s41, %s42
      %p56 = scmp.eq.s32.totalorder %s20, 1
      %p57 = por %p55, %p56
      %p59 = scmp.ne.s32.totalorder %s42, %s58
      %p60 = scmp.eq.s32.totalorder %s20, 0
      %p61 = por %p59, %p60
      %s63 = sadd.s32 %s62, 1
      %p66 = scmp.eq.s32.totalorder %s14, 1
      %p67 = scmp.ne.s32.totalorder %s62, %s64
      %p68 = scmp.eq.s32.totalorder %s14, 0
      %p69 = por %p67, %p68
      %p70 = scmp.ne.s32.totalorder %s62, %s64
      %p71 = scmp.eq.s32.totalorder %s19, 1
      %p72 = por %p70, %p71
      %p73 = scmp.ne.s32.totalorder %s64, %s65
      %p74 = scmp.eq.s32.totalorder %s19, 0
      %p75 = por %p73, %p74
      %p76 = scmp.ne.s32.totalorder %s64, %s65
      %p77 = scmp.eq.s32.totalorder %s20, 1
      %p78 = por %p76, %p77
      %p80 = scmp.ne.s32.totalorder %s65, %s79
      %p81 = scmp.eq.s32.totalorder %s20, 0
      %p82 = por %p80, %p81
      %s83 = ssub.s32 %s21, %s33
      %s84 = ssub.s32 %s22, %s29
      %s85 = sor.u32 %s83, %s84
      %p86 = scmp.eq.s32.totalorder %s85, 0
      %s88 = sadd.s32 %s87, 1
      %s89 = scalar_select %p86, %s87, %s88
      %p92 = pneg %p86
      %p93 = scmp.eq.s32.totalorder %s14, 1
      %p94 = por %p92, %p93
      %p95 = scmp.ne.s32.totalorder %s87, %s90
      %p96 = scmp.eq.s32.totalorder %s14, 0
      %p97 = por %p95, %p96
      %p98 = scmp.ne.s32.totalorder %s87, %s90
      %p99 = scmp.eq.s32.totalorder %s19, 1
      %p100 = por %p98, %p99
      %p101 = scmp.ne.s32.totalorder %s90, %s91
      %p102 = scmp.eq.s32.totalorder %s19, 0
      %p103 = por %p101, %p102
      %p104 = scmp.ne.s32.totalorder %s90, %s91
      %p105 = scmp.eq.s32.totalorder %s20, 1
      %p106 = por %p104, %p105
      %p108 = scmp.ne.s32.totalorder %s91, %s107
      %p109 = scmp.eq.s32.totalorder %s20, 0
      %p110 = por %p108, %p109
      %p111 = scmp.le.s32.totalorder 1, %s14
      %p112 = scmp.lt.s32.totalorder %s14, 3
      %p113 = pnand %p111, %p112
      %p114 = pneg %p113
      // Predicated region
      $region9: #{tpu_custom_call.1} parent=5 // pred_check
        _
      $region10: #{tpu_custom_call.1} parent=5 // pred_check_branch
        %116 = sbr.rel (%p113) target = $region12
      $region11: #{tpu_custom_call.1} parent=5 // pred_region
        %s117 = ssub.s32 %s14, 1
        // Predicated region
        $region13: #{tpu_custom_call.1} parent=11 // pred_check
          %p118 = pneg %p75
        $region14: #{tpu_custom_call.1} parent=11 // pred_check_branch
          %120 = sbr.rel (%p118) target = $region16
        $region15: #{tpu_custom_call.1} parent=11 // pred_region
          _
        $region16: #{tpu_custom_call.1} parent=11 // pred_fallthru
          _
      $region12: #{tpu_custom_call.1} parent=5 // pred_fallthru
        _
      %p121 = scmp.lt.s32.totalorder %s14, 2
      // Predicated region
      $region17: #{tpu_custom_call.1} parent=5 // pred_check
        %p122 = pneg %p121
      $region18: #{tpu_custom_call.1} parent=5 // pred_check_branch
        %124 = sbr.rel (%p122) target = $region20
      $region19: #{tpu_custom_call.1} parent=5 // pred_region
        // Predicated region
        $region21: #{tpu_custom_call.1} parent=19 // pred_check
          %p125 = pneg %p48
        $region22: #{tpu_custom_call.1} parent=19 // pred_check_branch
          %127 = sbr.rel (%p125) target = $region24
        $region23: #{tpu_custom_call.1} parent=19 // pred_region
          %s128 = sand.u32 %s38, 1
          %s129 = scalar_lea.sflag [#allocation3], %s128
          %s130 = sand.u32 %s38, 1
          %s131 = smul.addr %s130, 16
          %s132 = scalar_lea.vmem [#allocation2], %s131
          %s133 = smul.u32 2, %s22
          %s135 = ssub.s32 256, 256
          %136 = vsyncadd %s129, %s135
          %s137 = smul.addr %s21, 2
          %s138 = sadd.s32 %s133, %s137
          %s139 = smul.addr %s138, 128
          %s140 = scalar_lea.hbm %s0, %s139
          %s142 = sshll.u32 %s132, 4
          %s143 = int_to_ptr.vmem [resolvable:$true] %s142
          %145 = dma.hbm_to_vmem [thread:$0]  %s140, 256, %s143, %s129
        $region24: #{tpu_custom_call.1} parent=19 // pred_fallthru
          _
      $region20: #{tpu_custom_call.1} parent=5 // pred_fallthru
        _
      %p146 = scmp.le.s32.totalorder 1, %s14
      %p147 = scmp.lt.s32.totalorder %s14, 3
      %p148 = pnand %p146, %p147
      %p149 = pneg %p148
      // Predicated region
      $region25: #{tpu_custom_call.1} parent=5 // pred_check
        _
      $region26: #{tpu_custom_call.1} parent=5 // pred_check_branch
        %151 = sbr.rel (%p148) target = $region28
      $region27: #{tpu_custom_call.1} parent=5 // pred_region
        %s152 = ssub.s32 %s14, 1
        %s153 = sand.u32 %s41, 1
        %s154 = scalar_lea.sflag [#allocation3], %s153
        %s155 = sand.u32 %s41, 1
        %s156 = smul.addr %s155, 16
        %s157 = scalar_lea.vmem [#allocation2], %s156
        // Predicated region
        $region29: #{tpu_custom_call.1} parent=27 // pred_check
          %p158 = pneg %p54
        $region30: #{tpu_custom_call.1} parent=27 // pred_check_branch
          %160 = sbr.rel (%p158) target = $region32
        $region31: #{tpu_custom_call.1} parent=27 // pred_region
          %161 = dma.done %s154, 256
        $region32: #{tpu_custom_call.1} parent=27 // pred_fallthru
          _
        %s162 = sand.u32 %s41, 1
        %s163 = scalar_lea.sflag [#allocation3], %s162
        %s164 = sand.u32 %s41, 1
        %s165 = smul.addr %s164, 16
        %s166 = scalar_lea.vmem [#allocation2], %s165
        %p167 = pneg %p54
        %p168 = pneg %p51
        %p169 = pneg %p75
        %p170 = pneg %p72
        %p171 = pneg %p103
        %p172 = pneg %p100
        %s173 = sand.u32 %s90, 1
        %s174 = scalar_lea.sflag [#allocation4], %s173
        %s175 = sand.u32 %s90, 1
        %s176 = smul.addr %s175, 16
        %s177 = scalar_lea.vmem [#allocation5], %s176
        %s178 = smul.u32 2, %s24
        %s179 = smul.u32 2, %s24
        %v180 = vld [vmem:[%s157] sm:$0xff]
        %v181 = vld [vmem:[%s157 + $0x8] sm:$0xff]
        %v182 = vrot.slane %v180, 4
        %v183 = vadd.f32 %v180, %v182
        %v184 = vrot.slane %v183, 2
        %v185 = vadd.f32 %v183, %v184
        %v186 = vrot.slane %v185, 1
        %v187 = vadd.f32 %v185, %v186
        %v188 = vrot.slane %v181, 4
        %v189 = vadd.f32 %v181, %v188
        %v190 = vrot.slane %v189, 2
        %v191 = vadd.f32 %v189, %v190
        %v192 = vrot.slane %v191, 1
        %v193 = vadd.f32 %v191, %v192
        %v194 = vrcp.pop 8.0
        %v195 = vmul.f32 %v187, %v194
        %v196 = vmul.f32 %v193, %v194
        %v197 = vsub.f32 %v180, %v195
        %v198 = vsub.f32 %v181, %v196
        %v199 = vmul.f32 %v197, %v197
        %v200 = vmul.f32 %v198, %v198
        %v201 = vrot.slane %v199, 4
        %v202 = vadd.f32 %v199, %v201
        %v203 = vrot.slane %v202, 2
        %v204 = vadd.f32 %v202, %v203
        %v205 = vrot.slane %v204, 1
        %v206 = vadd.f32 %v204, %v205
        %v207 = vrot.slane %v200, 4
        %v208 = vadd.f32 %v200, %v207
        %v209 = vrot.slane %v208, 2
        %v210 = vadd.f32 %v208, %v209
        %v211 = vrot.slane %v210, 1
        %v212 = vadd.f32 %v210, %v211
        %v213 = vmul.f32 %v206, %v194
        %v214 = vmul.f32 %v212, %v194
        %v215 = vadd.f32 %v213, 1e-05
        %v216 = vadd.f32 %v214, 1e-05
        %v217 = vrsqrt.pop %v215
        %v218 = vrsqrt.pop %v216
        %v219 = vmul.f32 %v197, %v217
        %v220 = vmul.f32 %v198, %v218
        %v221 = vld [vmem:[%s1] sm:$0xff]
        %223 = vset.pattern.permute.xlu0 0
        %224 = vperm.xlu0 %223, %v221
        %v225 = vpop.permute.xlu0 %224
        %v227 = vmul.f32 %v219, %v225
        %v228 = vmul.f32 %v220, %v225
        %229 = vst [vmem:[%s177] sm:$0xff] %v227
        %230 = vst [vmem:[%s177 + $0x8] sm:$0xff] %v228
        %s231 = sand.u32 %s90, 1
        %s232 = scalar_lea.sflag [#allocation4], %s231
        %s233 = sand.u32 %s90, 1
        %s234 = smul.addr %s233, 16
        %s235 = scalar_lea.vmem [#allocation5], %s234
        // Predicated region
        $region33: #{tpu_custom_call.1} parent=27 // pred_check
          %p236 = pneg %p100
        $region34: #{tpu_custom_call.1} parent=27 // pred_check_branch
          %238 = sbr.rel (%p236) target = $region36
        $region35: #{tpu_custom_call.1} parent=27 // pred_region
          %s239 = smul.u32 2, %s24
          %s241 = ssub.s32 256, 256
          %242 = vsyncadd %s232, %s241
          %s243 = smul.addr %s23, 2
          %s244 = sadd.s32 %s239, %s243
          %s245 = smul.addr %s244, 128
          %s246 = scalar_lea.hbm %s2, %s245
          %s248 = sshll.u32 %s235, 4
          %s249 = int_to_ptr.vmem [resolvable:$true] %s248
          %251 = dma.vmem_to_hbm [thread:$0]  %s249, 256, %s246, %s232
        $region36: #{tpu_custom_call.1} parent=27 // pred_fallthru
          _
      $region28: #{tpu_custom_call.1} parent=5 // pred_fallthru
        _
      %p252 = scmp.le.s32.totalorder 2, %s14
      // Predicated region
      $region37: #{tpu_custom_call.1} parent=5 // pred_check
        %p253 = pneg %p252
      $region38: #{tpu_custom_call.1} parent=5 // pred_check_branch
        %255 = sbr.rel (%p253) target = $region40
      $region39: #{tpu_custom_call.1} parent=5 // pred_region
        %s256 = ssub.s32 %s14, 2
        // Predicated region
        $region41: #{tpu_custom_call.1} parent=39 // pred_check
          %p257 = pneg %p106
        $region42: #{tpu_custom_call.1} parent=39 // pred_check_branch
          %259 = sbr.rel (%p257) target = $region44
        $region43: #{tpu_custom_call.1} parent=39 // pred_region
          %s260 = sand.u32 %s91, 1
          %s261 = scalar_lea.sflag [#allocation4], %s260
          %s262 = sand.u32 %s91, 1
          %s263 = smul.addr %s262, 16
          %s264 = scalar_lea.vmem [#allocation5], %s263
          %265 = dma.done %s261, 256
        $region44: #{tpu_custom_call.1} parent=39 // pred_fallthru
          _
      $region40: #{tpu_custom_call.1} parent=5 // pred_fallthru
        _
    $region6: #{tpu_custom_call.1} parent=1 // loop_footer
      %s18 = sadd.s32 1, %s14
    $region7: #{tpu_custom_call.1} parent=1 // loop_footer_branch
      %13 = sbr.rel target = $region3
    $region8: #{tpu_custom_call.1} parent=1 // loop_exit
      _
    %266 = vsyncpa [#allocation3], 1
    %s267 = scalar_lea.sflag [#allocation3], 1
    %268 = vsyncpa %s267, 1
    %269 = vsyncpa [#allocation4], 1
    %s270 = scalar_lea.sflag [#allocation4], 1
    %271 = vsyncpa %s270, 1

</llo_original>
